<compile_context>
chip_gen: v7x
topology: tpu7x:2x2x1
jax: 0.10.0
libtpu: 0.0.40
codegen_flags: <defaults>
</compile_context>

<pallas_src>
import functools

import jax
import jax.numpy as jnp
from jax.experimental import pallas as pl
from jax.experimental.pallas import tpu as pltpu


def _round_up(a, b):
    return (a + b - 1) // b * b


def _space_model_kernel(x_ref, w_ref, proj_ref, logits_ref, acc_ref, *,
                        n_embed, inv_seq_len, use_vpu):
    # x_ref:      (TB, TS, E)
    # w_ref:      (E, O)        grid-invariant (same block every step -> no re-DMA)
    # proj_ref:   (TB, TS, O)
    # logits_ref: (TB, O)       resident across the S axis (same block every s)
    # acc_ref:    (TB, O) f32 scratch accumulator for the sequence sum
    s_tile = pl.program_id(1)

    @pl.when(s_tile == 0)
    def _init():
        acc_ref[...] = jnp.zeros_like(acc_ref)

    x = x_ref[...].astype(jnp.float32)   # (TB, TS, E)
    w = w_ref[...].astype(jnp.float32)   # (E, O)

    if use_vpu:
        # E is tiny: a (TS,E)x(E,O) contraction would use <1% of the MXU, so do an
        # unrolled broadcast multiply-accumulate on the VPU instead.
        y = x[:, :, 0:1] * w[0:1, :][None]            # (TB,TS,1)*(1,1,O) -> (TB,TS,O)
        for e in range(1, n_embed):
            y = y + x[:, :, e:e + 1] * w[e:e + 1, :][None]
    else:
        tb, ts, _ = x.shape
        y = jnp.dot(x.reshape(tb * ts, n_embed), w,
                    preferred_element_type=jnp.float32)
        y = y.reshape(tb, ts, w.shape[1])

    y = jnp.tanh(y)                                    # EUP
    proj_ref[...] = y.astype(proj_ref.dtype)

    # Running sum over the sequence tiles; zero-padded rows contribute exactly 0.
    acc_ref[...] += jnp.sum(y, axis=1)

    @pl.when(s_tile == pl.num_programs(1) - 1)
    def _finish():
        logits_ref[...] = (acc_ref[...] * inv_seq_len).astype(logits_ref.dtype)


def _choose_tiles(B, S, E, O, vmem_budget_bytes=12 * 1024 * 1024):
    """Pick (TB, TS) so double-buffered VMEM footprints stay well under budget."""
    # Lane/sublane-padded footprints (what the tiles actually occupy in VMEM).
    O_l = _round_up(O, 128)
    E_l = _round_up(E, 128)
    tb = B if B <= 8 else 8

    def vmem_bytes(tb_, ts_):
        x_b = tb_ * ts_ * E_l * 4
        p_b = tb_ * ts_ * O_l * 4
        w_b = _round_up(E, 8) * O_l * 4
        l_b = tb_ * O_l * 4
        a_b = tb_ * O_l * 4
        # inputs/outputs are double-buffered by the Pallas pipeline
        return 2 * (x_b + p_b + w_b + l_b) + a_b

    ts = 512
    while ts > 8 and (ts // 2 >= _round_up(S, 8)
                      or vmem_bytes(tb, ts) > vmem_budget_bytes):
        ts //= 2
    # Avoid pathological sequence-padding waste (> ~12.5% extra rows).
    while ts > 8 and (_round_up(S, ts) - S) * 8 > S:
        ts //= 2
    while tb > 1 and vmem_bytes(tb, ts) > vmem_budget_bytes:
        tb = max(1, tb // 2)
    return tb, ts


def space_model_forward(x, w, *, proj_dtype=None):
    """x: (B, S, E), w: (E, O)  ->  (logits (B, O), proj (B, S, O))."""
    B, S, E = x.shape
    Ew, O = w.shape
    assert Ew == E
    proj_dtype = proj_dtype or x.dtype

    tb, ts = _choose_tiles(B, S, E, O)
    B_pad = _round_up(B, tb)
    S_pad = _round_up(S, ts)

    # Zero padding is semantically safe: tanh(0 @ W) == 0, so padded rows add nothing
    # to the sequence sum; padded batches/rows are sliced off below (only if padded).
    x_p = x
    if (B_pad, S_pad) != (B, S):
        x_p = jnp.zeros((B_pad, S_pad, E), x.dtype).at[:B, :S, :].set(x)

    kernel = functools.partial(
        _space_model_kernel,
        n_embed=E,
        inv_seq_len=1.0 / float(S),
        use_vpu=(E <= 16),
    )

    grid = (B_pad // tb, S_pad // ts)
    proj_p, logits_p = pl.pallas_call(
        kernel,
        out_shape=(
            jax.ShapeDtypeStruct((B_pad, S_pad, O), proj_dtype),
            jax.ShapeDtypeStruct((B_pad, O), x.dtype),
        ),
        grid_spec=pltpu.PrefetchScalarGridSpec(
            num_scalar_prefetch=0,
            grid=grid,
            in_specs=[
                pl.BlockSpec((tb, ts, E), lambda b, s: (b, s, 0)),
                # W is grid-invariant; Pallas skips the re-DMA when the block
                # index does not change between steps.
                pl.BlockSpec((E, O), lambda b, s: (0, 0)),
            ],
            out_specs=[
                pl.BlockSpec((tb, ts, O), lambda b, s: (b, s, 0)),
                pl.BlockSpec((tb, O), lambda b, s: (b, 0)),
            ],
            scratch_shapes=[pltpu.VMEM((tb, O), jnp.float32)],
        ),
        compiler_params=pltpu.CompilerParams(
            dimension_semantics=("parallel", "arbitrary"),
        ),
    )(x_p, w)

    logits = logits_p if B_pad == B else logits_p[:B]
    proj = proj_p if (B_pad, S_pad) == (B, S) else proj_p[:B, :S]
    return logits, proj


def split_concept_spaces(proj, n_latent):
    """proj (B, S, n_spaces*n_latent) -> list of (B, S, n_latent), mirrors the module."""
    n_spaces = proj.shape[-1] // n_latent
    return [proj[..., i * n_latent:(i + 1) * n_latent] for i in range(n_spaces)]


def make_params(key, n_embed, n_latent, n_concept_spaces):
    """Deterministic init mimicking torch.nn.Linear (uniform +/- 1/sqrt(in))."""
    bound = 1.0 / jnp.sqrt(jnp.float32(n_embed))
    ws = []
    for _ in range(n_concept_spaces):
        key, sub = jax.random.split(key)
        # PyTorch Linear weight is (out, in); store transposed (in, out).
        w_i = jax.random.uniform(
            sub, (n_latent, n_embed), jnp.float32, minval=-bound, maxval=bound
        )
        ws.append(w_i.T)
    return jnp.concatenate(ws, axis=-1)  # (n_embed, n_concept_spaces * n_latent)


if __name__ == "__main__":
    # Module defaults: n_embed=3, n_latent=3, n_concept_spaces=2
    n_embed, n_latent, n_spaces = 3, 3, 2
    B, S = 2, 8

    key = jax.random.PRNGKey(0)
    kx, kw = jax.random.split(key)
    x = jax.random.normal(kx, (B, S, n_embed), jnp.float32)
    w = make_params(kw, n_embed, n_latent, n_spaces)  # (E, O)

    logits, proj = space_model_forward(x, w)
    jax.block_until_ready((logits, proj))

    # Pure-JAX reference (same math as the PyTorch forward).
    ref_proj = jnp.tanh(jnp.einsum("bse,eo->bso", x, w))
    ref_logits = ref_proj.mean(axis=1)
    assert proj.shape == (B, S, n_spaces * n_latent)
    assert logits.shape == (B, n_spaces * n_latent)
    assert jnp.allclose(proj, ref_proj, atol=1e-5, rtol=1e-5)
    assert jnp.allclose(logits, ref_logits, atol=1e-5, rtol=1e-5)

    # concept_spaces (list form of the module output) is a free slice of proj.
    spaces = split_concept_spaces(proj, n_latent)
    assert all(s.shape == (B, S, n_latent) for s in spaces)

    print("KERNEL_OK")
</pallas_src>

<mosaic_0001>
module attributes {stable_mosaic.version = 11 : i64} {
  func.func @_space_model_kernel(%arg0: i32, %arg1: i32, %arg2: memref<2x8x3xf32, #tpu.memory_space<vmem>>, %arg3: memref<3x6xf32, #tpu.memory_space<vmem>>, %arg4: memref<2x8x6xf32, #tpu.memory_space<vmem>>, %arg5: memref<2x6xf32, #tpu.memory_space<vmem>>, %arg6: memref<2x6xf32, #tpu.memory_space<vmem>>) attributes {dimension_semantics = [#tpu.dimension_semantics<parallel>, #tpu.dimension_semantics<arbitrary>], iteration_bounds = array<i64: 1, 1>, scalar_prefetch = 0 : i64, scratch_operands = 1 : i64, tpu.core_type = #tpu.core_type<tc>, window_params = [{transform_indices = @transform_0, window_bounds = array<i64: 2, 8, 3>}, {pipeline_mode = #tpu.pipeline_mode<synchronous>, transform_indices = @transform_1, window_bounds = array<i64: 3, 6>}, {transform_indices = @transform_2, window_bounds = array<i64: 2, 8, 6>}, {transform_indices = @transform_3, window_bounds = array<i64: 2, 6>}]} {
    %c0_i32 = arith.constant 0 : i32
    %0 = arith.cmpi eq, %arg1, %c0_i32 : i32
    %1 = arith.extui %0 : i1 to i32
    %c0_i32_0 = arith.constant 0 : i32
    %2 = arith.cmpi ne, %1, %c0_i32_0 : i32
    scf.if %2 {
      %cst_14 = arith.constant 0.000000e+00 : f32
      %34 = vector.broadcast %cst_14 : f32 to vector<2x6xf32>
      %c0_15 = arith.constant 0 : index
      %c0_16 = arith.constant 0 : index
      %35 = vector.load %arg6[%c0_15, %c0_16] : memref<2x6xf32, #tpu.memory_space<vmem>>, vector<2x6xf32>
      tpu.vector_store %arg6[%c0_15, %c0_16], %34 {strides = array<i32>} : memref<2x6xf32, #tpu.memory_space<vmem>>, vector<2x6xf32>,
    } else {
    }
    %c0 = arith.constant 0 : index
    %c0_1 = arith.constant 0 : index
    %c0_2 = arith.constant 0 : index
    %3 = vector.load %arg2[%c0, %c0_1, %c0_2] : memref<2x8x3xf32, #tpu.memory_space<vmem>>, vector<2x8x3xf32>
    %c0_3 = arith.constant 0 : index
    %c0_4 = arith.constant 0 : index
    %4 = vector.load %arg3[%c0_3, %c0_4] : memref<3x6xf32, #tpu.memory_space<vmem>>, vector<3x6xf32>
    %5 = vector.extract_strided_slice %3 {offsets = [0, 0, 0], sizes = [2, 8, 1], strides = [1, 1, 1]} : vector<2x8x3xf32> to vector<2x8x1xf32>
    %6 = vector.extract_strided_slice %4 {offsets = [0, 0], sizes = [1, 6], strides = [1, 1]} : vector<3x6xf32> to vector<1x6xf32>
    %7 = vector.shape_cast %6 : vector<1x6xf32> to vector<1x1x6xf32>
    %8 = vector.broadcast %5 : vector<2x8x1xf32> to vector<2x8x6xf32>
    %9 = vector.broadcast %7 : vector<1x1x6xf32> to vector<2x8x6xf32>
    %10 = arith.mulf %8, %9 : vector<2x8x6xf32>
    %11 = vector.extract_strided_slice %3 {offsets = [0, 0, 1], sizes = [2, 8, 1], strides = [1, 1, 1]} : vector<2x8x3xf32> to vector<2x8x1xf32>
    %12 = vector.extract_strided_slice %4 {offsets = [1, 0], sizes = [1, 6], strides = [1, 1]} : vector<3x6xf32> to vector<1x6xf32>
    %13 = vector.shape_cast %12 : vector<1x6xf32> to vector<1x1x6xf32>
    %14 = vector.broadcast %11 : vector<2x8x1xf32> to vector<2x8x6xf32>
    %15 = vector.broadcast %13 : vector<1x1x6xf32> to vector<2x8x6xf32>
    %16 = arith.mulf %14, %15 : vector<2x8x6xf32>
    %17 = arith.addf %10, %16 : vector<2x8x6xf32>
    %18 = vector.extract_strided_slice %3 {offsets = [0, 0, 2], sizes = [2, 8, 1], strides = [1, 1, 1]} : vector<2x8x3xf32> to vector<2x8x1xf32>
    %19 = vector.extract_strided_slice %4 {offsets = [2, 0], sizes = [1, 6], strides = [1, 1]} : vector<3x6xf32> to vector<1x6xf32>
    %20 = vector.shape_cast %19 : vector<1x6xf32> to vector<1x1x6xf32>
    %21 = vector.broadcast %18 : vector<2x8x1xf32> to vector<2x8x6xf32>
    %22 = vector.broadcast %20 : vector<1x1x6xf32> to vector<2x8x6xf32>
    %23 = arith.mulf %21, %22 : vector<2x8x6xf32>
    %24 = arith.addf %17, %23 : vector<2x8x6xf32>
    %25 = math.tanh %24 : vector<2x8x6xf32>
    %c0_5 = arith.constant 0 : index
    %c0_6 = arith.constant 0 : index
    %c0_7 = arith.constant 0 : index
    %26 = vector.load %arg4[%c0_5, %c0_6, %c0_7] : memref<2x8x6xf32, #tpu.memory_space<vmem>>, vector<2x8x6xf32>
    tpu.vector_store %arg4[%c0_5, %c0_6, %c0_7], %25 {strides = array<i32>} : memref<2x8x6xf32, #tpu.memory_space<vmem>>, vector<2x8x6xf32>,
    %c0_8 = arith.constant 0 : index
    %c0_9 = arith.constant 0 : index
    %27 = vector.load %arg6[%c0_8, %c0_9] : memref<2x6xf32, #tpu.memory_space<vmem>>, vector<2x6xf32>
    %cst = arith.constant dense<0.000000e+00> : vector<2x6xf32>
    %28 = vector.multi_reduction <add>, %25, %cst [1] : vector<2x8x6xf32> to vector<2x6xf32>
    %29 = arith.addf %27, %28 : vector<2x6xf32>
    %c0_10 = arith.constant 0 : index
    %c0_11 = arith.constant 0 : index
    %30 = vector.load %arg6[%c0_10, %c0_11] : memref<2x6xf32, #tpu.memory_space<vmem>>, vector<2x6xf32>
    tpu.vector_store %arg6[%c0_10, %c0_11], %29 {strides = array<i32>} : memref<2x6xf32, #tpu.memory_space<vmem>>, vector<2x6xf32>,
    %c0_i32_12 = arith.constant 0 : i32
    %31 = arith.cmpi eq, %arg1, %c0_i32_12 : i32
    %32 = arith.extui %31 : i1 to i32
    %c0_i32_13 = arith.constant 0 : i32
    %33 = arith.cmpi ne, %32, %c0_i32_13 : i32
    scf.if %33 {
      %c0_14 = arith.constant 0 : index
      %c0_15 = arith.constant 0 : index
      %34 = vector.load %arg6[%c0_14, %c0_15] : memref<2x6xf32, #tpu.memory_space<vmem>>, vector<2x6xf32>
      %cst_16 = arith.constant 1.250000e-01 : f32
      %35 = vector.broadcast %cst_16 : f32 to vector<2x6xf32>
      %36 = arith.mulf %34, %35 : vector<2x6xf32>
      %c0_17 = arith.constant 0 : index
      %c0_18 = arith.constant 0 : index
      %37 = vector.load %arg5[%c0_17, %c0_18] : memref<2x6xf32, #tpu.memory_space<vmem>>, vector<2x6xf32>
      tpu.vector_store %arg5[%c0_17, %c0_18], %36 {strides = array<i32>} : memref<2x6xf32, #tpu.memory_space<vmem>>, vector<2x6xf32>,
    } else {
    }
    return
  }
  func.func @transform_0(%arg0: i32, %arg1: i32) -> (i32, i32, i32) {
    %c0_i32 = arith.constant 0 : i32
    %c0_i32_0 = arith.constant 0 : i32
    return %arg0, %arg1, %c0_i32 : i32, i32, i32
  }
  func.func @transform_1(%arg0: i32, %arg1: i32) -> (i32, i32) {
    %c0_i32 = arith.constant 0 : i32
    %c0_i32_0 = arith.constant 0 : i32
    %c0_i32_1 = arith.constant 0 : i32
    return %c0_i32, %c0_i32_0 : i32, i32
  }
  func.func @transform_2(%arg0: i32, %arg1: i32) -> (i32, i32, i32) {
    %c0_i32 = arith.constant 0 : i32
    %c0_i32_0 = arith.constant 0 : i32
    return %arg0, %arg1, %c0_i32 : i32, i32, i32
  }
  func.func @transform_3(%arg0: i32, %arg1: i32) -> (i32, i32) {
    %c0_i32 = arith.constant 0 : i32
    %c0_i32_0 = arith.constant 0 : i32
    return %arg0, %c0_i32 : i32, i32
  }
}

</mosaic_0001>

<llo_original>
// kernel: tpu_custom_call.1
$region0: #{tpu_custom_call.1}
  #allocation0 [shape = 'u32[]', space=smem, size = 0x4, offset = 0x4, fixed_abs, tag = 'smem constant byte address 0x4 - core index']
  #allocation1 [shape = 'u32[144,128]{1,0:T(1,128)}', space=vmem, size = 0x12000, scoped, tag = 'internal scratch']
  #allocation2 [shape = 'f32[2,6]{1,0:T(2,128)}', space=vmem, size = 0x400, scoped, tag = 'scratch operand']
  %s0 = inlined_call_operand.vmem [shape: f32[2,8,3], index: 0, kind: input, shape index: {}]
  %s1 = inlined_call_operand.vmem [shape: f32[3,6], index: 1, kind: input, shape index: {}]
  %s2 = inlined_call_operand.vmem [shape: f32[2,8,6], index: 2, kind: output, shape index: {0}]
  %s3 = inlined_call_operand.hbm [shape: f32[2,6], index: 3, kind: output, shape index: {1}]
  %4 = xla_tuple %s2, %s3
  %s5 = sld [smem:[#allocation0]]
  $region34: #{tpu_custom_call.1} parent=0
    _
  %s7 = ssub.s32 1, %s5
  %s8 = scalar_select 0, %s7, %s5
  $region1: #{tpu_custom_call.1} parent=0
    #allocation3 [shape = 'u8[1024]{0}', space=vmem, size = 0x400, scoped, tag = 'output window, operand 1, single buffered']
    #allocation4 [shape = 's32[1]{0}', space=sflag, size = 0x4, scoped, tag = 'scoped memory for tpu_custom_call.1']
    %9 = vsyncpa [#allocation4], 0
    // Predicated region
    $region2: #{tpu_custom_call.1} parent=1 // pred_check
      _
    $region3: #{tpu_custom_call.1} parent=1 // pred_check_branch
      %11 = sbr.rel (0) target = $region5
    $region4: #{tpu_custom_call.1} parent=1 // pred_region
      _
    $region5: #{tpu_custom_call.1} parent=1 // pred_fallthru
      _
    // Predicated region
    $region6: #{tpu_custom_call.1} parent=1 // pred_check
      _
    $region7: #{tpu_custom_call.1} parent=1 // pred_check_branch
      %13 = sbr.rel (0) target = $region9
    $region8: #{tpu_custom_call.1} parent=1 // pred_region
      _
    $region9: #{tpu_custom_call.1} parent=1 // pred_fallthru
      _
    %p14 = scmp.eq.s32.totalorder 0, 0
    // Predicated region
    $region10: #{tpu_custom_call.1} parent=1 // pred_check
      %p15 = pneg %p14
    $region11: #{tpu_custom_call.1} parent=1 // pred_check_branch
      %17 = sbr.rel (%p15) target = $region13
    $region12: #{tpu_custom_call.1} parent=1 // pred_region
      %vm18 = vcmask 41984
      %19 = vst.msk [vmem:[#allocation2] sm:$0x3] %vm18, 0.0
    $region13: #{tpu_custom_call.1} parent=1 // pred_fallthru
      _
    %v20 = vld [vmem:[%s0] sm:$0xff]
    %v21 = vld [vmem:[%s0 + $0x8] sm:$0xff]
    %v22 = vld [vmem:[%s1] sm:$0x7]
    %24 = vset.pattern.permute.xlu0 0
    %25 = vperm.xlu0 %24, %v20
    %v26 = vpop.permute.xlu0 %25
    %29 = vset.pattern.permute.xlu0 0
    %30 = vperm.xlu0 %29, %v21
    %v31 = vpop.permute.xlu0 %30
    %v33 = vlaneseq
    %v34 = vshrl.u32 %v33, 7
    %v35 = vsub.s32 0, %v34
    %v36 = vrot.slane %v22, %v35
    %v37 = vmul.f32 %v26, %v36
    %v38 = vmul.f32 %v31, %v36
    %39 = vset.pattern.permute.xlu0 1
    %40 = vperm.xlu0 %39, %v20
    %v41 = vpop.permute.xlu0 %40
    %43 = vset.pattern.permute.xlu0 1
    %44 = vperm.xlu0 %43, %v21
    %v45 = vpop.permute.xlu0 %44
    %v47 = vlaneseq
    %v48 = vshrl.u32 %v47, 7
    %v49 = vsub.s32 1, %v48
    %v50 = vrot.slane %v22, %v49
    %v51 = vmul.f32 %v41, %v50
    %v52 = vmul.f32 %v45, %v50
    %v53 = vadd.f32 %v37, %v51
    %v54 = vadd.f32 %v38, %v52
    %55 = vset.pattern.permute.xlu0 2
    %56 = vperm.xlu0 %55, %v20
    %v57 = vpop.permute.xlu0 %56
    %59 = vset.pattern.permute.xlu0 2
    %60 = vperm.xlu0 %59, %v21
    %v61 = vpop.permute.xlu0 %60
    %v63 = vlaneseq
    %v64 = vshrl.u32 %v63, 7
    %v65 = vsub.s32 2, %v64
    %v66 = vrot.slane %v22, %v65
    %v67 = vmul.f32 %v57, %v66
    %v68 = vmul.f32 %v61, %v66
    %v69 = vadd.f32 %v53, %v67
    %v70 = vadd.f32 %v54, %v68
    %v71 = vtanh.pop %v69
    %v72 = vtanh.pop %v70
    %vm73 = vcmask 48128
    %74 = vst.msk [vmem:[%s2] sm:$0xff] %vm73, %v71
    %75 = vst.msk [vmem:[%s2 + $0x8] sm:$0xff] %vm73, %v72
    %v76 = vld [vmem:[#allocation2] sm:$0x3]
    %v77 = vsel %vm73, %v71, 0.0
    %v78 = vrot.slane %v77, 4
    %v79 = vadd.f32 %v77, %v78
    %v80 = vrot.slane %v79, 2
    %v81 = vadd.f32 %v79, %v80
    %v82 = vrot.slane %v81, 1
    %v83 = vadd.f32 %v81, %v82
    %v84 = vsel %vm73, %v72, 0.0
    %v85 = vrot.slane %v84, 4
    %v86 = vadd.f32 %v84, %v85
    %v87 = vrot.slane %v86, 2
    %v88 = vadd.f32 %v86, %v87
    %v89 = vrot.slane %v88, 1
    %v90 = vadd.f32 %v88, %v89
    %vm93 = vcmask 1041409
    %v94 = vsel %vm93, %v90, %v83
    %v96 = vadd.f32 %v76, %v94
    %vm97 = vcmask 41984
    %98 = vst.msk [vmem:[#allocation2] sm:$0x3] %vm97, %v96
    // Predicated region
    $region14: #{tpu_custom_call.1} parent=1 // pred_check
      %p99 = pneg %p14
    $region15: #{tpu_custom_call.1} parent=1 // pred_check_branch
      %101 = sbr.rel (%p99) target = $region17
    $region16: #{tpu_custom_call.1} parent=1 // pred_region
      %v102 = vld [vmem:[#allocation2] sm:$0x3]
      %v103 = vmul.f32 %v102, 0.125
      %104 = vst.msk [vmem:[#allocation3] sm:$0x3] %vm97, %v103
    $region17: #{tpu_custom_call.1} parent=1 // pred_fallthru
      _
    // Predicated region
    $region18: #{tpu_custom_call.1} parent=1 // pred_check
      _
    $region19: #{tpu_custom_call.1} parent=1 // pred_check_branch
      %106 = sbr.rel (0) target = $region21
    $region20: #{tpu_custom_call.1} parent=1 // pred_region
      _
    $region21: #{tpu_custom_call.1} parent=1 // pred_fallthru
      _
    // Predicated region
    $region22: #{tpu_custom_call.1} parent=1 // pred_check
      _
    $region23: #{tpu_custom_call.1} parent=1 // pred_check_branch
      %108 = sbr.rel (0) target = $region25
    $region24: #{tpu_custom_call.1} parent=1 // pred_region
      %s110 = ssub.s32 32, 32
      %111 = vsyncadd [#allocation4], %s110
      %s113 = sshll.u32 [#allocation3], 4
      %s114 = int_to_ptr.vmem [resolvable:$true] %s113
      %116 = dma.vmem_to_hbm [thread:$0]  %s114, 32, %s3, [#allocation4]
    $region25: #{tpu_custom_call.1} parent=1 // pred_fallthru
      _
    // Predicated region
    $region26: #{tpu_custom_call.1} parent=1 // pred_check
      _
    $region27: #{tpu_custom_call.1} parent=1 // pred_check_branch
      %118 = sbr.rel (0) target = $region29
    $region28: #{tpu_custom_call.1} parent=1 // pred_region
      _
    $region29: #{tpu_custom_call.1} parent=1 // pred_fallthru
      _
    // Predicated region
    $region30: #{tpu_custom_call.1} parent=1 // pred_check
      _
    $region31: #{tpu_custom_call.1} parent=1 // pred_check_branch
      %120 = sbr.rel (0) target = $region33
    $region32: #{tpu_custom_call.1} parent=1 // pred_region
      %121 = dma.done [#allocation4], 32
    $region33: #{tpu_custom_call.1} parent=1 // pred_fallthru
      _
    %122 = vsyncpa [#allocation4], 1

</llo_original>
